<compile_context>
chip_gen: v6e
topology: v6e:2x2x1
jax: 0.10.0
libtpu: 0.0.40
codegen_flags: <defaults>
</compile_context>

<pallas_src>
import functools

import jax
import jax.numpy as jnp
from jax.experimental import pallas as pl
from jax.experimental.pallas import tpu as pltpu

LN_EPS = 1e-5  # PyTorch nn.LayerNorm default


def _round_up(a, b):
    return (a + b - 1) // b * b


def _layernorm_relu(h, gamma, beta, true_f):
    """LayerNorm over the last (possibly zero-padded) axis + ReLU, bf16 output.

    Requires: padded columns of `h` are exactly 0 and `gamma`/`beta` are zero-padded,
    so the padded columns of the result are exactly 0 as well.
    """
    f_pad = h.shape[-1]
    inv_f = 1.0 / true_f
    mean = jnp.sum(h, axis=-1, keepdims=True) * inv_f          # pads are 0 -> mean correct
    xc = h - mean
    sq = jnp.sum(xc * xc, axis=-1, keepdims=True)
    if f_pad != true_f:
        # In the padded columns xc == -mean; remove that contribution with a per-row
        # scalar correction instead of a tile-wide iota+select mask.
        sq = sq - (f_pad - true_f) * (mean * mean)
    inv = jax.lax.rsqrt(sq * inv_f + LN_EPS)
    y = (xc * inv) * gamma + beta                              # pad cols: gamma=beta=0 -> 0
    return jnp.maximum(y, 0.0).astype(jnp.bfloat16)


def traj_decoder_kernel(
    x_ref,            # (tm, dim)          f32  (true feature width, no lane pad)
    w1_ref, v1_ref,   # (dim, hid_pad)     bf16, (3, hid_pad) f32 [bias; gamma; beta]
    w2_ref, v2_ref,   # (hid_pad, dim_pad) bf16, (3, dim_pad) f32
    w3_ref, v3_ref,   # (dim_pad, dim_pad) bf16, (3, dim_pad) f32
    w4_ref, b4_ref,   # (dim_pad, out_pad) bf16, (1, out_pad) f32
    out_ref,          # (tm, out_pad)      bf16
    *, dim, hid,
):
    x = x_ref[...].astype(jnp.bfloat16)     # cast in VMEM; MXU runs with K = dim

    # Linear(dim, 2*dim) -> LayerNorm -> ReLU
    h = jnp.dot(x, w1_ref[...], preferred_element_type=jnp.float32) + v1_ref[0:1, :]
    h = _layernorm_relu(h, v1_ref[1:2, :], v1_ref[2:3, :], hid)

    # Linear(2*dim, dim) -> LayerNorm -> ReLU
    h = jnp.dot(h, w2_ref[...], preferred_element_type=jnp.float32) + v2_ref[0:1, :]
    h = _layernorm_relu(h, v2_ref[1:2, :], v2_ref[2:3, :], dim)

    # Linear(dim, dim) -> LayerNorm -> ReLU
    h = jnp.dot(h, w3_ref[...], preferred_element_type=jnp.float32) + v3_ref[0:1, :]
    h = _layernorm_relu(h, v3_ref[1:2, :], v3_ref[2:3, :], dim)

    # Linear(dim, output_dim)
    y = jnp.dot(h, w4_ref[...], preferred_element_type=jnp.float32) + b4_ref[...]
    out_ref[...] = y.astype(out_ref.dtype)


def pack_params(params, *, dim, multimodal, future_step):
    """One-time (init-time) repack of the module parameters into kernel layout:
    lane-pad feature axes to multiples of 128, cast weights to bf16, and pack each
    layer's [bias; gamma; beta] into one (3, F_pad) f32 array."""
    (w1, b1, g1, be1, w2, b2, g2, be2, w3, b3, g3, be3, w4, b4) = params
    hid = w1.shape[1]
    output_dim = multimodal * (future_step * 3 + 1)
    hid_pad = _round_up(hid, 128)
    dim_pad = _round_up(dim, 128)
    out_pad = _round_up(output_dim, 128)

    def pad2(a, r, c):
        return jnp.pad(a, ((0, r - a.shape[0]), (0, c - a.shape[1])))

    w1p = pad2(w1, dim, hid_pad).astype(jnp.bfloat16)       # K left at the true dim
    w2p = pad2(w2, hid_pad, dim_pad).astype(jnp.bfloat16)
    w3p = pad2(w3, dim_pad, dim_pad).astype(jnp.bfloat16)
    w4p = pad2(w4, dim_pad, out_pad).astype(jnp.bfloat16)
    v1 = jnp.concatenate([pad2(b1, 1, hid_pad), pad2(g1, 1, hid_pad), pad2(be1, 1, hid_pad)], 0)
    v2 = jnp.concatenate([pad2(b2, 1, dim_pad), pad2(g2, 1, dim_pad), pad2(be2, 1, dim_pad)], 0)
    v3 = jnp.concatenate([pad2(b3, 1, dim_pad), pad2(g3, 1, dim_pad), pad2(be3, 1, dim_pad)], 0)
    b4p = pad2(b4, 1, out_pad)
    return (w1p, v1, w2p, v2, w3p, v3, w4p, b4p)


def _choose_tile_and_vmem(rows, dim, hid_pad, out_pad, param_bytes):
    """Derive the row tile from a generation-aware VMEM budget."""
    try:
        vmem_cap = int(pltpu.get_tpu_info().vmem_capacity_bytes)
    except Exception:
        vmem_cap = 64 * 1024 * 1024        # v7x per-core VMEM (smallest current generation)
    budget = int(0.70 * vmem_cap)

    def vmem_need(tm):
        x_stream = 2 * tm * dim * 4                         # double-buffered f32 input tile
        o_stream = 2 * tm * out_pad * 2                     # double-buffered bf16 output tile
        inter = 3 * tm * hid_pad * 4 + 2 * tm * hid_pad * 2  # f32 LN temps + bf16 activations
        return 2 * param_bytes + x_stream + o_stream + inter  # params double-buffered

    tm = 16
    for cand in (1024, 768, 512, 384, 256, 192, 128, 96, 64, 48, 32, 16):
        if vmem_need(cand) <= budget:
            tm = cand
            break

    # Keep the grid at >= 2 steps whenever rows allow so dimension_semantics=("parallel",)
    # can shard rows across both TensorCores on v7x (no cost on single-TC v5e/v6e).
    tm = max(min(tm, _round_up(pl.cdiv(rows, 2), 16)), 16)

    vmem_limit = int(min(max(2 * vmem_need(tm), 32 * 1024 * 1024), 0.9 * vmem_cap))
    return tm, vmem_limit


def traj_decoder_forward(x, packed_params, *, multimodal, future_step):
    """x: (B, N, dim) + pack_params output -> (traj (B,N,M,T,3), confidence (B,N,M))."""
    B, N, dim = x.shape
    one_modal = future_step * 3 + 1
    output_dim = multimodal * one_modal
    rows = B * N
    hid = 2 * dim                                   # module spec: nn.Linear(dim, dim * 2)

    (w1p, v1, w2p, v2, w3p, v3, w4p, b4p) = packed_params
    hid_pad, dim_pad, out_pad = w1p.shape[1], w2p.shape[1], w4p.shape[1]

    param_bytes = sum(int(a.size) * a.dtype.itemsize for a in packed_params)
    tm, vmem_limit = _choose_tile_and_vmem(rows, dim, hid_pad, out_pad, param_bytes)

    rows_pad = _round_up(rows, tm)
    x2d = x.reshape(rows, dim)
    if rows_pad != rows:
        x2d = jnp.pad(x2d, ((0, rows_pad - rows), (0, 0)))   # row pad only; no lane pad/cast
    grid = (rows_pad // tm,)

    x_spec = pl.BlockSpec((tm, dim), lambda i: (i, 0))        # full (true) feature width
    out_spec = pl.BlockSpec((tm, out_pad), lambda i: (i, 0))  # lane-dense bf16 writeback
    # Constant-index (whole small array every step) parameter specs.  Default buffering;
    # the VMEM budget above accounts for the 2x parameter footprint.
    param_specs = [pl.BlockSpec(a.shape, lambda i: (0, 0)) for a in packed_params]

    kernel = functools.partial(traj_decoder_kernel, dim=dim, hid=hid)

    y2d = pl.pallas_call(
        kernel,
        out_shape=jax.ShapeDtypeStruct((rows_pad, out_pad), jnp.bfloat16),
        grid=grid,
        in_specs=[x_spec] + param_specs,
        out_specs=out_spec,
        compiler_params=pltpu.CompilerParams(
            dimension_semantics=("parallel",),
            vmem_limit_bytes=vmem_limit),
    )(x2d, *packed_params)

    dec = y2d[:rows, :output_dim].astype(jnp.float32).reshape(B, N, multimodal, one_modal)
    traj = dec[:, :, :, :-1].reshape(B, N, multimodal, future_step, 3)
    confidence = dec[:, :, :, -1]
    return traj, confidence


def init_params(key, dim, multimodal, future_step):
    one_modal = future_step * 3 + 1
    output_dim = multimodal * one_modal
    hid = dim * 2

    ks = jax.random.split(key, 8)

    def lin(kw, kb, fan_in, fan_out):
        bound = 1.0 / jnp.sqrt(fan_in)
        w = jax.random.uniform(kw, (fan_in, fan_out), jnp.float32, -bound, bound)
        b = jax.random.uniform(kb, (1, fan_out), jnp.float32, -bound, bound)
        return w, b

    w1, b1 = lin(ks[0], ks[1], dim, hid)
    w2, b2 = lin(ks[2], ks[3], hid, dim)
    w3, b3 = lin(ks[4], ks[5], dim, dim)
    w4, b4 = lin(ks[6], ks[7], dim, output_dim)

    g1, be1 = jnp.ones((1, hid), jnp.float32), jnp.zeros((1, hid), jnp.float32)
    g2, be2 = jnp.ones((1, dim), jnp.float32), jnp.zeros((1, dim), jnp.float32)
    g3, be3 = jnp.ones((1, dim), jnp.float32), jnp.zeros((1, dim), jnp.float32)

    return (w1, b1, g1, be1,
            w2, b2, g2, be2,
            w3, b3, g3, be3,
            w4, b4)


def reference_forward(x, params, *, multimodal, future_step):
    """Pure-JAX f32 reference matching the PyTorch module."""
    (w1, b1, g1, be1, w2, b2, g2, be2, w3, b3, g3, be3, w4, b4) = params

    def ln(h, g, b):
        m = jnp.mean(h, -1, keepdims=True)
        v = jnp.mean((h - m) ** 2, -1, keepdims=True)
        return (h - m) / jnp.sqrt(v + LN_EPS) * g + b

    h = jnp.maximum(ln(x @ w1 + b1, g1, be1), 0.0)
    h = jnp.maximum(ln(h @ w2 + b2, g2, be2), 0.0)
    h = jnp.maximum(ln(h @ w3 + b3, g3, be3), 0.0)
    y = h @ w4 + b4
    B, N = x.shape[0], x.shape[1]
    one_modal = future_step * 3 + 1
    dec = y.reshape(B, N, multimodal, one_modal)
    traj = dec[:, :, :, :-1].reshape(B, N, multimodal, future_step, 3)
    conf = dec[:, :, :, -1]
    return traj, conf


if __name__ == "__main__":
    # Small shapes consistent with the module's forward:
    # input (batch, obs_num, dim); multimodal modes, future_step steps.
    batch, obs_num, dim = 2, 8, 32
    multimodal, future_step = 4, 8

    key = jax.random.PRNGKey(0)
    kx, kp = jax.random.split(key)
    x = jax.random.normal(kx, (batch, obs_num, dim), jnp.float32)
    params = init_params(kp, dim, multimodal, future_step)
    # One-time repack into kernel layout (done once, outside the per-call jit path).
    packed = pack_params(params, dim=dim, multimodal=multimodal, future_step=future_step)

    fwd = functools.partial(
        traj_decoder_forward, multimodal=multimodal, future_step=future_step)
    traj, conf = jax.jit(fwd)(x, packed)
    traj = jax.block_until_ready(traj)
    conf = jax.block_until_ready(conf)

    # Correctness check against pure-f32 JAX reference.  The kernel uses bf16 MXU operands,
    # f32 accumulation/LayerNorm and a bf16 output tile, so use bf16-appropriate tolerances.
    traj_ref, conf_ref = reference_forward(
        x, params, multimodal=multimodal, future_step=future_step)
    assert traj.shape == (batch, obs_num, multimodal, future_step, 3)
    assert conf.shape == (batch, obs_num, multimodal)
    assert jnp.allclose(traj, traj_ref, atol=5e-2, rtol=5e-2)
    assert jnp.allclose(conf, conf_ref, atol=5e-2, rtol=5e-2)

    print("KERNEL_OK")
</pallas_src>

<mosaic_0001>
module attributes {stable_mosaic.version = 11 : i64} {
  func.func @traj_decoder_kernel(%arg0: i32, %arg1: memref<16x32xf32, #tpu.memory_space<vmem>>, %arg2: memref<32x128xbf16, #tpu.memory_space<vmem>>, %arg3: memref<3x128xf32, #tpu.memory_space<vmem>>, %arg4: memref<128x128xbf16, #tpu.memory_space<vmem>>, %arg5: memref<3x128xf32, #tpu.memory_space<vmem>>, %arg6: memref<128x128xbf16, #tpu.memory_space<vmem>>, %arg7: memref<3x128xf32, #tpu.memory_space<vmem>>, %arg8: memref<128x128xbf16, #tpu.memory_space<vmem>>, %arg9: memref<1x128xf32, #tpu.memory_space<vmem>>, %arg10: memref<16x128xbf16, #tpu.memory_space<vmem>>) attributes {dimension_semantics = [#tpu.dimension_semantics<parallel>], iteration_bounds = array<i64: 1>, scalar_prefetch = 0 : i64, scratch_operands = 0 : i64, tpu.core_type = #tpu.core_type<tc>, window_params = [{transform_indices = @transform_0, window_bounds = array<i64: 16, 32>}, {pipeline_mode = #tpu.pipeline_mode<synchronous>, transform_indices = @transform_1, window_bounds = array<i64: 32, 128>}, {pipeline_mode = #tpu.pipeline_mode<synchronous>, transform_indices = @transform_2, window_bounds = array<i64: 3, 128>}, {pipeline_mode = #tpu.pipeline_mode<synchronous>, transform_indices = @transform_3, window_bounds = array<i64: 128, 128>}, {pipeline_mode = #tpu.pipeline_mode<synchronous>, transform_indices = @transform_4, window_bounds = array<i64: 3, 128>}, {pipeline_mode = #tpu.pipeline_mode<synchronous>, transform_indices = @transform_5, window_bounds = array<i64: 128, 128>}, {pipeline_mode = #tpu.pipeline_mode<synchronous>, transform_indices = @transform_6, window_bounds = array<i64: 3, 128>}, {pipeline_mode = #tpu.pipeline_mode<synchronous>, transform_indices = @transform_7, window_bounds = array<i64: 128, 128>}, {pipeline_mode = #tpu.pipeline_mode<synchronous>, transform_indices = @transform_8, window_bounds = array<i64: 1, 128>}, {transform_indices = @transform_9, window_bounds = array<i64: 16, 128>}]} {
    %c0 = arith.constant 0 : index
    %c0_0 = arith.constant 0 : index
    %0 = vector.load %arg1[%c0, %c0_0] : memref<16x32xf32, #tpu.memory_space<vmem>>, vector<16x32xf32>
    %1 = arith.truncf %0 : vector<16x32xf32> to vector<16x32xbf16>
    %c0_1 = arith.constant 0 : index
    %c0_2 = arith.constant 0 : index
    %2 = vector.load %arg2[%c0_1, %c0_2] : memref<32x128xbf16, #tpu.memory_space<vmem>>, vector<32x128xbf16>
    %cst = arith.constant dense<0.000000e+00> : vector<16x128xf32>
    %3 = tpu.matmul %1, %2, %cst {dimension_numbers = #tpu.dot_dimension_numbers<[1], [0], [0], [1], [0, 0, 1, 1], [], []>} : vector<16x32xbf16>, vector<32x128xbf16>, vector<16x128xf32> -> vector<16x128xf32>
    %c0_3 = arith.constant 0 : index
    %c0_4 = arith.constant 0 : index
    %4 = vector.load %arg3[%c0_3, %c0_4] : memref<3x128xf32, #tpu.memory_space<vmem>>, vector<1x128xf32>
    %5 = vector.broadcast %4 : vector<1x128xf32> to vector<16x128xf32>
    %6 = arith.addf %3, %5 : vector<16x128xf32>
    %c1 = arith.constant 1 : index
    %c0_5 = arith.constant 0 : index
    %7 = vector.load %arg3[%c1, %c0_5] : memref<3x128xf32, #tpu.memory_space<vmem>>, vector<1x128xf32>
    %c2 = arith.constant 2 : index
    %c0_6 = arith.constant 0 : index
    %8 = vector.load %arg3[%c2, %c0_6] : memref<3x128xf32, #tpu.memory_space<vmem>>, vector<1x128xf32>
    %cst_7 = arith.constant dense<0.000000e+00> : vector<16xf32>
    %9 = vector.multi_reduction <add>, %6, %cst_7 [1] : vector<16x128xf32> to vector<16xf32>
    %10 = vector.shape_cast %9 : vector<16xf32> to vector<16x1xf32>
    %cst_8 = arith.constant 1.562500e-02 : f32
    %11 = vector.broadcast %cst_8 : f32 to vector<16x1xf32>
    %12 = arith.mulf %10, %11 : vector<16x1xf32>
    %13 = vector.broadcast %12 : vector<16x1xf32> to vector<16x128xf32>
    %14 = arith.subf %6, %13 : vector<16x128xf32>
    %15 = arith.mulf %14, %14 : vector<16x128xf32>
    %cst_9 = arith.constant dense<0.000000e+00> : vector<16xf32>
    %16 = vector.multi_reduction <add>, %15, %cst_9 [1] : vector<16x128xf32> to vector<16xf32>
    %17 = vector.shape_cast %16 : vector<16xf32> to vector<16x1xf32>
    %18 = arith.mulf %12, %12 : vector<16x1xf32>
    %cst_10 = arith.constant 6.400000e+01 : f32
    %19 = vector.broadcast %cst_10 : f32 to vector<16x1xf32>
    %20 = arith.mulf %19, %18 : vector<16x1xf32>
    %21 = arith.subf %17, %20 : vector<16x1xf32>
    %cst_11 = arith.constant 1.562500e-02 : f32
    %22 = vector.broadcast %cst_11 : f32 to vector<16x1xf32>
    %23 = arith.mulf %21, %22 : vector<16x1xf32>
    %cst_12 = arith.constant 9.99999974E-6 : f32
    %24 = vector.broadcast %cst_12 : f32 to vector<16x1xf32>
    %25 = arith.addf %23, %24 : vector<16x1xf32>
    %26 = math.rsqrt %25 : vector<16x1xf32>
    %27 = vector.broadcast %26 : vector<16x1xf32> to vector<16x128xf32>
    %28 = arith.mulf %14, %27 : vector<16x128xf32>
    %29 = vector.broadcast %7 : vector<1x128xf32> to vector<16x128xf32>
    %30 = arith.mulf %28, %29 : vector<16x128xf32>
    %31 = vector.broadcast %8 : vector<1x128xf32> to vector<16x128xf32>
    %32 = arith.addf %30, %31 : vector<16x128xf32>
    %cst_13 = arith.constant 0.000000e+00 : f32
    %33 = vector.broadcast %cst_13 : f32 to vector<16x128xf32>
    %34 = arith.maximumf %32, %33 : vector<16x128xf32>
    %35 = arith.truncf %34 : vector<16x128xf32> to vector<16x128xbf16>
    %c0_14 = arith.constant 0 : index
    %c0_15 = arith.constant 0 : index
    %36 = vector.load %arg4[%c0_14, %c0_15] : memref<128x128xbf16, #tpu.memory_space<vmem>>, vector<128x128xbf16>
    %cst_16 = arith.constant dense<0.000000e+00> : vector<16x128xf32>
    %37 = tpu.matmul %35, %36, %cst_16 {dimension_numbers = #tpu.dot_dimension_numbers<[1], [0], [0], [1], [0, 0, 1, 1], [], []>} : vector<16x128xbf16>, vector<128x128xbf16>, vector<16x128xf32> -> vector<16x128xf32>
    %c0_17 = arith.constant 0 : index
    %c0_18 = arith.constant 0 : index
    %38 = vector.load %arg5[%c0_17, %c0_18] : memref<3x128xf32, #tpu.memory_space<vmem>>, vector<1x128xf32>
    %39 = vector.broadcast %38 : vector<1x128xf32> to vector<16x128xf32>
    %40 = arith.addf %37, %39 : vector<16x128xf32>
    %c1_19 = arith.constant 1 : index
    %c0_20 = arith.constant 0 : index
    %41 = vector.load %arg5[%c1_19, %c0_20] : memref<3x128xf32, #tpu.memory_space<vmem>>, vector<1x128xf32>
    %c2_21 = arith.constant 2 : index
    %c0_22 = arith.constant 0 : index
    %42 = vector.load %arg5[%c2_21, %c0_22] : memref<3x128xf32, #tpu.memory_space<vmem>>, vector<1x128xf32>
    %cst_23 = arith.constant dense<0.000000e+00> : vector<16xf32>
    %43 = vector.multi_reduction <add>, %40, %cst_23 [1] : vector<16x128xf32> to vector<16xf32>
    %44 = vector.shape_cast %43 : vector<16xf32> to vector<16x1xf32>
    %cst_24 = arith.constant 3.125000e-02 : f32
    %45 = vector.broadcast %cst_24 : f32 to vector<16x1xf32>
    %46 = arith.mulf %44, %45 : vector<16x1xf32>
    %47 = vector.broadcast %46 : vector<16x1xf32> to vector<16x128xf32>
    %48 = arith.subf %40, %47 : vector<16x128xf32>
    %49 = arith.mulf %48, %48 : vector<16x128xf32>
    %cst_25 = arith.constant dense<0.000000e+00> : vector<16xf32>
    %50 = vector.multi_reduction <add>, %49, %cst_25 [1] : vector<16x128xf32> to vector<16xf32>
    %51 = vector.shape_cast %50 : vector<16xf32> to vector<16x1xf32>
    %52 = arith.mulf %46, %46 : vector<16x1xf32>
    %cst_26 = arith.constant 9.600000e+01 : f32
    %53 = vector.broadcast %cst_26 : f32 to vector<16x1xf32>
    %54 = arith.mulf %53, %52 : vector<16x1xf32>
    %55 = arith.subf %51, %54 : vector<16x1xf32>
    %cst_27 = arith.constant 3.125000e-02 : f32
    %56 = vector.broadcast %cst_27 : f32 to vector<16x1xf32>
    %57 = arith.mulf %55, %56 : vector<16x1xf32>
    %cst_28 = arith.constant 9.99999974E-6 : f32
    %58 = vector.broadcast %cst_28 : f32 to vector<16x1xf32>
    %59 = arith.addf %57, %58 : vector<16x1xf32>
    %60 = math.rsqrt %59 : vector<16x1xf32>
    %61 = vector.broadcast %60 : vector<16x1xf32> to vector<16x128xf32>
    %62 = arith.mulf %48, %61 : vector<16x128xf32>
    %63 = vector.broadcast %41 : vector<1x128xf32> to vector<16x128xf32>
    %64 = arith.mulf %62, %63 : vector<16x128xf32>
    %65 = vector.broadcast %42 : vector<1x128xf32> to vector<16x128xf32>
    %66 = arith.addf %64, %65 : vector<16x128xf32>
    %cst_29 = arith.constant 0.000000e+00 : f32
    %67 = vector.broadcast %cst_29 : f32 to vector<16x128xf32>
    %68 = arith.maximumf %66, %67 : vector<16x128xf32>
    %69 = arith.truncf %68 : vector<16x128xf32> to vector<16x128xbf16>
    %c0_30 = arith.constant 0 : index
    %c0_31 = arith.constant 0 : index
    %70 = vector.load %arg6[%c0_30, %c0_31] : memref<128x128xbf16, #tpu.memory_space<vmem>>, vector<128x128xbf16>
    %cst_32 = arith.constant dense<0.000000e+00> : vector<16x128xf32>
    %71 = tpu.matmul %69, %70, %cst_32 {dimension_numbers = #tpu.dot_dimension_numbers<[1], [0], [0], [1], [0, 0, 1, 1], [], []>} : vector<16x128xbf16>, vector<128x128xbf16>, vector<16x128xf32> -> vector<16x128xf32>
    %c0_33 = arith.constant 0 : index
    %c0_34 = arith.constant 0 : index
    %72 = vector.load %arg7[%c0_33, %c0_34] : memref<3x128xf32, #tpu.memory_space<vmem>>, vector<1x128xf32>
    %73 = vector.broadcast %72 : vector<1x128xf32> to vector<16x128xf32>
    %74 = arith.addf %71, %73 : vector<16x128xf32>
    %c1_35 = arith.constant 1 : index
    %c0_36 = arith.constant 0 : index
    %75 = vector.load %arg7[%c1_35, %c0_36] : memref<3x128xf32, #tpu.memory_space<vmem>>, vector<1x128xf32>
    %c2_37 = arith.constant 2 : index
    %c0_38 = arith.constant 0 : index
    %76 = vector.load %arg7[%c2_37, %c0_38] : memref<3x128xf32, #tpu.memory_space<vmem>>, vector<1x128xf32>
    %cst_39 = arith.constant dense<0.000000e+00> : vector<16xf32>
    %77 = vector.multi_reduction <add>, %74, %cst_39 [1] : vector<16x128xf32> to vector<16xf32>
    %78 = vector.shape_cast %77 : vector<16xf32> to vector<16x1xf32>
    %cst_40 = arith.constant 3.125000e-02 : f32
    %79 = vector.broadcast %cst_40 : f32 to vector<16x1xf32>
    %80 = arith.mulf %78, %79 : vector<16x1xf32>
    %81 = vector.broadcast %80 : vector<16x1xf32> to vector<16x128xf32>
    %82 = arith.subf %74, %81 : vector<16x128xf32>
    %83 = arith.mulf %82, %82 : vector<16x128xf32>
    %cst_41 = arith.constant dense<0.000000e+00> : vector<16xf32>
    %84 = vector.multi_reduction <add>, %83, %cst_41 [1] : vector<16x128xf32> to vector<16xf32>
    %85 = vector.shape_cast %84 : vector<16xf32> to vector<16x1xf32>
    %86 = arith.mulf %80, %80 : vector<16x1xf32>
    %cst_42 = arith.constant 9.600000e+01 : f32
    %87 = vector.broadcast %cst_42 : f32 to vector<16x1xf32>
    %88 = arith.mulf %87, %86 : vector<16x1xf32>
    %89 = arith.subf %85, %88 : vector<16x1xf32>
    %cst_43 = arith.constant 3.125000e-02 : f32
    %90 = vector.broadcast %cst_43 : f32 to vector<16x1xf32>
    %91 = arith.mulf %89, %90 : vector<16x1xf32>
    %cst_44 = arith.constant 9.99999974E-6 : f32
    %92 = vector.broadcast %cst_44 : f32 to vector<16x1xf32>
    %93 = arith.addf %91, %92 : vector<16x1xf32>
    %94 = math.rsqrt %93 : vector<16x1xf32>
    %95 = vector.broadcast %94 : vector<16x1xf32> to vector<16x128xf32>
    %96 = arith.mulf %82, %95 : vector<16x128xf32>
    %97 = vector.broadcast %75 : vector<1x128xf32> to vector<16x128xf32>
    %98 = arith.mulf %96, %97 : vector<16x128xf32>
    %99 = vector.broadcast %76 : vector<1x128xf32> to vector<16x128xf32>
    %100 = arith.addf %98, %99 : vector<16x128xf32>
    %cst_45 = arith.constant 0.000000e+00 : f32
    %101 = vector.broadcast %cst_45 : f32 to vector<16x128xf32>
    %102 = arith.maximumf %100, %101 : vector<16x128xf32>
    %103 = arith.truncf %102 : vector<16x128xf32> to vector<16x128xbf16>
    %c0_46 = arith.constant 0 : index
    %c0_47 = arith.constant 0 : index
    %104 = vector.load %arg8[%c0_46, %c0_47] : memref<128x128xbf16, #tpu.memory_space<vmem>>, vector<128x128xbf16>
    %cst_48 = arith.constant dense<0.000000e+00> : vector<16x128xf32>
    %105 = tpu.matmul %103, %104, %cst_48 {dimension_numbers = #tpu.dot_dimension_numbers<[1], [0], [0], [1], [0, 0, 1, 1], [], []>} : vector<16x128xbf16>, vector<128x128xbf16>, vector<16x128xf32> -> vector<16x128xf32>
    %c0_49 = arith.constant 0 : index
    %c0_50 = arith.constant 0 : index
    %106 = vector.load %arg9[%c0_49, %c0_50] : memref<1x128xf32, #tpu.memory_space<vmem>>, vector<1x128xf32>
    %107 = vector.broadcast %106 : vector<1x128xf32> to vector<16x128xf32>
    %108 = arith.addf %105, %107 : vector<16x128xf32>
    %109 = arith.truncf %108 : vector<16x128xf32> to vector<16x128xbf16>
    %c0_51 = arith.constant 0 : index
    %c0_52 = arith.constant 0 : index
    %110 = vector.load %arg10[%c0_51, %c0_52] : memref<16x128xbf16, #tpu.memory_space<vmem>>, vector<16x128xbf16>
    tpu.vector_store %arg10[%c0_51, %c0_52], %109 {strides = array<i32>} : memref<16x128xbf16, #tpu.memory_space<vmem>>, vector<16x128xbf16>,
    return
  }
  func.func @transform_0(%arg0: i32) -> (i32, i32) {
    %c0_i32 = arith.constant 0 : i32
    %c0_i32_0 = arith.constant 0 : i32
    return %arg0, %c0_i32 : i32, i32
  }
  func.func @transform_1(%arg0: i32) -> (i32, i32) {
    %c0_i32 = arith.constant 0 : i32
    %c0_i32_0 = arith.constant 0 : i32
    %c0_i32_1 = arith.constant 0 : i32
    return %c0_i32, %c0_i32_0 : i32, i32
  }
  func.func @transform_2(%arg0: i32) -> (i32, i32) {
    %c0_i32 = arith.constant 0 : i32
    %c0_i32_0 = arith.constant 0 : i32
    %c0_i32_1 = arith.constant 0 : i32
    return %c0_i32, %c0_i32_0 : i32, i32
  }
  func.func @transform_3(%arg0: i32) -> (i32, i32) {
    %c0_i32 = arith.constant 0 : i32
    %c0_i32_0 = arith.constant 0 : i32
    %c0_i32_1 = arith.constant 0 : i32
    return %c0_i32, %c0_i32_0 : i32, i32
  }
  func.func @transform_4(%arg0: i32) -> (i32, i32) {
    %c0_i32 = arith.constant 0 : i32
    %c0_i32_0 = arith.constant 0 : i32
    %c0_i32_1 = arith.constant 0 : i32
    return %c0_i32, %c0_i32_0 : i32, i32
  }
  func.func @transform_5(%arg0: i32) -> (i32, i32) {
    %c0_i32 = arith.constant 0 : i32
    %c0_i32_0 = arith.constant 0 : i32
    %c0_i32_1 = arith.constant 0 : i32
    return %c0_i32, %c0_i32_0 : i32, i32
  }
  func.func @transform_6(%arg0: i32) -> (i32, i32) {
    %c0_i32 = arith.constant 0 : i32
    %c0_i32_0 = arith.constant 0 : i32
    %c0_i32_1 = arith.constant 0 : i32
    return %c0_i32, %c0_i32_0 : i32, i32
  }
  func.func @transform_7(%arg0: i32) -> (i32, i32) {
    %c0_i32 = arith.constant 0 : i32
    %c0_i32_0 = arith.constant 0 : i32
    %c0_i32_1 = arith.constant 0 : i32
    return %c0_i32, %c0_i32_0 : i32, i32
  }
  func.func @transform_8(%arg0: i32) -> (i32, i32) {
    %c0_i32 = arith.constant 0 : i32
    %c0_i32_0 = arith.constant 0 : i32
    %c0_i32_1 = arith.constant 0 : i32
    return %c0_i32, %c0_i32_0 : i32, i32
  }
  func.func @transform_9(%arg0: i32) -> (i32, i32) {
    %c0_i32 = arith.constant 0 : i32
    %c0_i32_0 = arith.constant 0 : i32
    return %arg0, %c0_i32 : i32, i32
  }
}

</mosaic_0001>

<llo_original>
// kernel: traj_decoder_forward.1
$region0: #{traj_decoder_forward.1}
  #allocation0 [shape = 'u32[]', space=smem, size = 0x4, offset = 0x4, fixed_abs, tag = 'smem constant byte address 0x4 - core index']
  #allocation1 [shape = 'u32[144,128]{1,0:T(1,128)}', space=vmem, size = 0x12000, scoped, tag = 'internal scratch']
  %s0 = inlined_call_operand.hbm [shape: f32[16,32], index: 0, kind: input, shape index: {}]
  %s1 = inlined_call_operand.hbm [shape: bf16[32,128], index: 1, kind: input, shape index: {}]
  %s2 = inlined_call_operand.vmem [shape: f32[3,128], index: 2, kind: input, shape index: {}]
  %s3 = inlined_call_operand.hbm [shape: bf16[128,128], index: 3, kind: input, shape index: {}]
  %s4 = inlined_call_operand.vmem [shape: f32[3,128], index: 4, kind: input, shape index: {}]
  %s5 = inlined_call_operand.hbm [shape: bf16[128,128], index: 5, kind: input, shape index: {}]
  %s6 = inlined_call_operand.vmem [shape: f32[3,128], index: 6, kind: input, shape index: {}]
  %s7 = inlined_call_operand.hbm [shape: bf16[128,128], index: 7, kind: input, shape index: {}]
  %s8 = inlined_call_operand.vmem [shape: f32[1,128], index: 8, kind: input, shape index: {}]
  %s9 = inlined_call_operand.vmem [shape: bf16[16,128], index: 9, kind: output, shape index: {}]
  %s10 = sld [smem:[#allocation0]]
  $region66: #{traj_decoder_forward.1} parent=0
    _
  %s12 = ssub.s32 1, %s10
  %s13 = scalar_select 0, %s12, %s10
  $region1: #{traj_decoder_forward.1} parent=0
    #allocation2 [shape = 'u8[8192]{0}', space=vmem, size = 0x2000, scoped, tag = 'input window, operand 0, single buffered']
    #allocation3 [shape = 's32[1]{0}', space=sflag, size = 0x4, scoped, tag = 'scoped memory for traj_decoder_forward.1']
    #allocation4 [shape = 'u8[8192]{0}', space=vmem, size = 0x2000, scoped, tag = 'input window, operand 1, single buffered']
    #allocation5 [shape = 's32[1]{0}', space=sflag, size = 0x4, scoped, tag = 'scoped memory for traj_decoder_forward.1']
    #allocation6 [shape = 'u8[32768]{0}', space=vmem, size = 0x8000, scoped, tag = 'input window, operand 3, single buffered']
    #allocation7 [shape = 'u8[32768]{0}', space=vmem, size = 0x8000, scoped, tag = 'input window, operand 5, single buffered']
    #allocation8 [shape = 's32[1]{0}', space=sflag, size = 0x4, scoped, tag = 'scoped memory for traj_decoder_forward.1']
    #allocation9 [shape = 'u8[32768]{0}', space=vmem, size = 0x8000, scoped, tag = 'input window, operand 7, single buffered']
    %14 = vsyncpa [#allocation3], 0
    %15 = vsyncpa [#allocation5], 0
    %16 = vsyncpa [#allocation8], 0
    // Predicated region
    $region2: #{traj_decoder_forward.1} parent=1 // pred_check
      _
    $region3: #{traj_decoder_forward.1} parent=1 // pred_check_branch
      %18 = sbr.rel (0) target = $region5
    $region4: #{traj_decoder_forward.1} parent=1 // pred_region
      %s20 = ssub.s32 256, 256
      %21 = vsyncadd [#allocation3], %s20
      %s22 = sshll.u32 [#allocation2], 4
      %s23 = int_to_ptr.vmem [resolvable:$true] %s22
      %28 = dma.hbm_to_vmem [thread:$0]  %s0, 256, %s23, [#allocation3], 128, 128, 8
    $region5: #{traj_decoder_forward.1} parent=1 // pred_fallthru
      _
    // Predicated region
    $region6: #{traj_decoder_forward.1} parent=1 // pred_check
      _
    $region7: #{traj_decoder_forward.1} parent=1 // pred_check_branch
      %30 = sbr.rel (0) target = $region9
    $region8: #{traj_decoder_forward.1} parent=1 // pred_region
      %s32 = ssub.s32 256, 256
      %33 = vsyncadd [#allocation5], %s32
      %s34 = sshll.u32 [#allocation4], 4
      %s35 = int_to_ptr.vmem [resolvable:$true] %s34
      %40 = dma.hbm_to_vmem [thread:$0]  %s1, 256, %s35, [#allocation5], 64, 64, 4
    $region9: #{traj_decoder_forward.1} parent=1 // pred_fallthru
      _
    // Predicated region
    $region10: #{traj_decoder_forward.1} parent=1 // pred_check
      _
    $region11: #{traj_decoder_forward.1} parent=1 // pred_check_branch
      %42 = sbr.rel (0) target = $region13
    $region12: #{traj_decoder_forward.1} parent=1 // pred_region
      _
    $region13: #{traj_decoder_forward.1} parent=1 // pred_fallthru
      _
    // Predicated region
    $region14: #{traj_decoder_forward.1} parent=1 // pred_check
      _
    $region15: #{traj_decoder_forward.1} parent=1 // pred_check_branch
      %44 = sbr.rel (0) target = $region17
    $region16: #{traj_decoder_forward.1} parent=1 // pred_region
      %s46 = ssub.s32 1024, 1024
      %47 = vsyncadd [#allocation5], %s46
      %s48 = sshll.u32 [#allocation6], 4
      %s49 = int_to_ptr.vmem [resolvable:$true] %s48
      %54 = dma.hbm_to_vmem [thread:$0]  %s3, 1024, %s49, [#allocation5], 64, 64, 4
    $region17: #{traj_decoder_forward.1} parent=1 // pred_fallthru
      _
    // Predicated region
    $region18: #{traj_decoder_forward.1} parent=1 // pred_check
      _
    $region19: #{traj_decoder_forward.1} parent=1 // pred_check_branch
      %56 = sbr.rel (0) target = $region21
    $region20: #{traj_decoder_forward.1} parent=1 // pred_region
      _
    $region21: #{traj_decoder_forward.1} parent=1 // pred_fallthru
      _
    // Predicated region
    $region22: #{traj_decoder_forward.1} parent=1 // pred_check
      _
    $region23: #{traj_decoder_forward.1} parent=1 // pred_check_branch
      %58 = sbr.rel (0) target = $region25
    $region24: #{traj_decoder_forward.1} parent=1 // pred_region
      %s60 = ssub.s32 1024, 1024
      %61 = vsyncadd [#allocation8], %s60
      %s62 = sshll.u32 [#allocation7], 4
      %s63 = int_to_ptr.vmem [resolvable:$true] %s62
      %68 = dma.hbm_to_vmem [thread:$0]  %s5, 1024, %s63, [#allocation8], 64, 64, 4
    $region25: #{traj_decoder_forward.1} parent=1 // pred_fallthru
      _
    // Predicated region
    $region26: #{traj_decoder_forward.1} parent=1 // pred_check
      _
    $region27: #{traj_decoder_forward.1} parent=1 // pred_check_branch
      %70 = sbr.rel (0) target = $region29
    $region28: #{traj_decoder_forward.1} parent=1 // pred_region
      _
    $region29: #{traj_decoder_forward.1} parent=1 // pred_fallthru
      _
    // Predicated region
    $region30: #{traj_decoder_forward.1} parent=1 // pred_check
      _
    $region31: #{traj_decoder_forward.1} parent=1 // pred_check_branch
      %72 = sbr.rel (0) target = $region33
    $region32: #{traj_decoder_forward.1} parent=1 // pred_region
      %s74 = ssub.s32 1024, 1024
      %75 = vsyncadd [#allocation8], %s74
      %s76 = sshll.u32 [#allocation9], 4
      %s77 = int_to_ptr.vmem [resolvable:$true] %s76
      %82 = dma.hbm_to_vmem [thread:$0]  %s7, 1024, %s77, [#allocation8], 64, 64, 4
    $region33: #{traj_decoder_forward.1} parent=1 // pred_fallthru
      _
    // Predicated region
    $region34: #{traj_decoder_forward.1} parent=1 // pred_check
      _
    $region35: #{traj_decoder_forward.1} parent=1 // pred_check_branch
      %84 = sbr.rel (0) target = $region37
    $region36: #{traj_decoder_forward.1} parent=1 // pred_region
      _
    $region37: #{traj_decoder_forward.1} parent=1 // pred_fallthru
      _
    // Predicated region
    $region38: #{traj_decoder_forward.1} parent=1 // pred_check
      _
    $region39: #{traj_decoder_forward.1} parent=1 // pred_check_branch
      %86 = sbr.rel (0) target = $region41
    $region40: #{traj_decoder_forward.1} parent=1 // pred_region
      %87 = dma.done [#allocation3], 256
    $region41: #{traj_decoder_forward.1} parent=1 // pred_fallthru
      _
    // Predicated region
    $region42: #{traj_decoder_forward.1} parent=1 // pred_check
      _
    $region43: #{traj_decoder_forward.1} parent=1 // pred_check_branch
      %89 = sbr.rel (0) target = $region45
    $region44: #{traj_decoder_forward.1} parent=1 // pred_region
      %90 = dma.done [#allocation5], 256
    $region45: #{traj_decoder_forward.1} parent=1 // pred_fallthru
      _
    // Predicated region
    $region46: #{traj_decoder_forward.1} parent=1 // pred_check
      _
    $region47: #{traj_decoder_forward.1} parent=1 // pred_check_branch
      %92 = sbr.rel (0) target = $region49
    $region48: #{traj_decoder_forward.1} parent=1 // pred_region
      %93 = dma.done [#allocation5], 1024
    $region49: #{traj_decoder_forward.1} parent=1 // pred_fallthru
      _
    // Predicated region
    $region50: #{traj_decoder_forward.1} parent=1 // pred_check
      _
    $region51: #{traj_decoder_forward.1} parent=1 // pred_check_branch
      %95 = sbr.rel (0) target = $region53
    $region52: #{traj_decoder_forward.1} parent=1 // pred_region
      %96 = dma.done [#allocation8], 1024
    $region53: #{traj_decoder_forward.1} parent=1 // pred_fallthru
      _
    // Predicated region
    $region54: #{traj_decoder_forward.1} parent=1 // pred_check
      _
    $region55: #{traj_decoder_forward.1} parent=1 // pred_check_branch
      %98 = sbr.rel (0) target = $region57
    $region56: #{traj_decoder_forward.1} parent=1 // pred_region
      %99 = dma.done [#allocation8], 1024
    $region57: #{traj_decoder_forward.1} parent=1 // pred_fallthru
      _
    %v101 = vld [vmem:[#allocation2] sm:$0xff]
    %v102 = vld [vmem:[#allocation2 + $0x8] sm:$0xff]
    %v103 = vpack.c.bf16 %v102, %v101
    %v104 = vld [vmem:[#allocation4] sm:$0xf]
    %v105 = vld [vmem:[#allocation4 + $0x4] sm:$0xf]
    %v106 = vld [vmem:[#allocation4 + $0x8] sm:$0xf]
    %v107 = vld [vmem:[#allocation4 + $0xc] sm:$0xf]
    %v108 = vld [vmem:[%s2] sm:$0x1]
    %v109 = vlaneseq
    %v110 = vshrl.u32 %v109, 7
    %v111 = vsub.s32 0, %v110
    %v112 = vrot.slane %v108, %v111
    %v117 = vunpack.c.l.b16 %v104
    %v118 = vunpack.c.l.b16 %v105
    %v119 = vunpack.c.l.b16 %v106
    %v120 = vunpack.c.l.b16 %v107
    %v121 = vpack.c.b16 %v118, %v117
    %v122 = vpack.c.b16 %v120, %v119
    %vm125 = vcmask 261120
    %v127 = vsel %vm125, %v103, 0
    %129 = vmatprep.subr.bf16.mxu0 0
    %130 = vmatpush1.bf16.msra.mxu0 0
    %131 = vmatprep.subr.bf16.mxu0 0
    %132 = vmatpush1.bf16.msra.mxu0 0
    %133 = vmatprep.subr.bf16.mxu0 0
    %134 = vmatpush1.bf16.msra.mxu0 0
    %135 = vmatprep.subr.bf16.mxu0 0
    %136 = vmatpush1.bf16.msra.mxu0 0
    %137 = vmatprep.subr.bf16.mxu0 0
    %138 = vmatpush1.bf16.msra.mxu0 0
    %139 = vmatprep.subr.bf16.mxu0 0
    %140 = vmatpush1.bf16.msra.mxu0 0
    %141 = vmatprep.subr.bf16.mxu0 0
    %142 = vmatpush1.bf16.msra.mxu0 %v122
    %143 = vmatprep.subr.bf16.mxu0 0
    %144 = vmatpush1.bf16.msra.mxu0 %v121
    %145 = vmatprep.subr.bf16.mxu0 0
    %146 = vmatpush2.bf16.msra.mxu0 0
    %147 = vmatprep.subr.bf16.mxu0 0
    %148 = vmatpush2.bf16.msra.mxu0 0
    %149 = vmatprep.subr.bf16.mxu0 0
    %150 = vmatpush2.bf16.msra.mxu0 0
    %151 = vmatprep.subr.bf16.mxu0 0
    %152 = vmatpush2.bf16.msra.mxu0 0
    %153 = vmatprep.subr.bf16.mxu0 0
    %154 = vmatpush2.bf16.msra.mxu0 0
    %155 = vmatprep.subr.bf16.mxu0 0
    %156 = vmatpush2.bf16.msra.mxu0 0
    %157 = vmatprep.subr.bf16.mxu0 0
    %158 = vmatpush2.bf16.msra.mxu0 0
    %159 = vmatprep.subr.bf16.mxu0 0
    %160 = vmatpush2.bf16.msra.mxu0 0
    %161 = vmatprep.mubr.bf16.mxu0 0
    %162 = vmatmul.mubr.bf16.gmra.mxu0 %v127
    %v163 = vpop.f32.mrf.mxu0
    %v164 = vadd.f32 %v112, %v163
    %v165 = vpop.f32.mrf.mxu0
    %v166 = vpop.f32.mrf.mxu0
    %v167 = vadd.f32 %v112, %v166
    %v168 = vpop.f32.mrf.mxu0
    %169 = vdwg.mxu0
    %v170 = vld [vmem:[%s2 + $0x1] sm:$0x1]
    %v171 = vld [vmem:[%s2 + $0x2] sm:$0x1]
    %172 = vadd.xlane.f32.xlu0 %v164
    %v173 = vpop.xlane.xlu0 %172
    %174 = vadd.xlane.f32.xlu0 %v167
    %v175 = vpop.xlane.xlu0 %174
    %v176 = vmul.f32 %v173, 0.015625
    %v177 = vmul.f32 %v175, 0.015625
    %v178 = vsub.f32 %v164, %v176
    %v179 = vsub.f32 %v167, %v177
    %v180 = vmul.f32 %v178, %v178
    %v181 = vmul.f32 %v179, %v179
    %182 = vadd.xlane.f32.xlu0 %v180
    %v183 = vpop.xlane.xlu0 %182
    %184 = vadd.xlane.f32.xlu0 %v181
    %v185 = vpop.xlane.xlu0 %184
    %v186 = vmul.f32 %v176, %v176
    %v187 = vmul.f32 %v177, %v177
    %v188 = vmul.f32 %v186, 64.0
    %v189 = vmul.f32 %v187, 64.0
    %v190 = vsub.f32 %v183, %v188
    %v191 = vsub.f32 %v185, %v189
    %v192 = vmul.f32 %v190, 0.015625
    %v193 = vmul.f32 %v191, 0.015625
    %v194 = vadd.f32 %v192, 1e-05
    %v195 = vadd.f32 %v193, 1e-05
    %v196 = vrsqrt.pop %v194
    %v197 = vrsqrt.pop %v195
    %v198 = vmul.f32 %v178, %v196
    %v199 = vmul.f32 %v179, %v197
    %v200 = vlaneseq
    %v201 = vshrl.u32 %v200, 7
    %v202 = vsub.s32 0, %v201
    %v203 = vrot.slane %v170, %v202
    %v204 = vmul.f32 %v198, %v203
    %v205 = vmul.f32 %v199, %v203
    %v206 = vlaneseq
    %v207 = vshrl.u32 %v206, 7
    %v208 = vsub.s32 0, %v207
    %v209 = vrot.slane %v171, %v208
    %v210 = vadd.f32 %v204, %v209
    %v211 = vadd.f32 %v205, %v209
    %v212 = vmax.f32 %v210, 0.0
    %v213 = vmax.f32 %v211, 0.0
    %v214 = vpack.c.bf16 %v213, %v212
    %v215 = vld [vmem:[#allocation6] sm:$0xf]
    %v216 = vld [vmem:[#allocation6 + $0x4] sm:$0xf]
    %v217 = vld [vmem:[#allocation6 + $0x8] sm:$0xf]
    %v218 = vld [vmem:[#allocation6 + $0xc] sm:$0xf]
    %v219 = vld [vmem:[#allocation6 + $0x10] sm:$0xf]
    %v220 = vld [vmem:[#allocation6 + $0x14] sm:$0xf]
    %v221 = vld [vmem:[#allocation6 + $0x18] sm:$0xf]
    %v222 = vld [vmem:[#allocation6 + $0x1c] sm:$0xf]
    %v223 = vld [vmem:[#allocation6 + $0x20] sm:$0xf]
    %v224 = vld [vmem:[#allocation6 + $0x24] sm:$0xf]
    %v225 = vld [vmem:[#allocation6 + $0x28] sm:$0xf]
    %v226 = vld [vmem:[#allocation6 + $0x2c] sm:$0xf]
    %v227 = vld [vmem:[#allocation6 + $0x30] sm:$0xf]
    %v228 = vld [vmem:[#allocation6 + $0x34] sm:$0xf]
    %v229 = vld [vmem:[#allocation6 + $0x38] sm:$0xf]
    %v230 = vld [vmem:[#allocation6 + $0x3c] sm:$0xf]
    %v231 = vld [vmem:[%s4] sm:$0x1]
    %v232 = vlaneseq
    %v233 = vshrl.u32 %v232, 7
    %v234 = vsub.s32 0, %v233
    %v235 = vrot.slane %v231, %v234
    %v252 = vunpack.c.l.b16 %v215
    %v253 = vunpack.c.l.b16 %v216
    %v254 = vunpack.c.l.b16 %v217
    %v255 = vunpack.c.l.b16 %v218
    %v256 = vunpack.c.l.b16 %v219
    %v257 = vunpack.c.l.b16 %v220
    %v258 = vunpack.c.l.b16 %v221
    %v259 = vunpack.c.l.b16 %v222
    %v260 = vunpack.c.l.b16 %v223
    %v261 = vunpack.c.l.b16 %v224
    %v262 = vunpack.c.l.b16 %v225
    %v263 = vunpack.c.l.b16 %v226
    %v264 = vunpack.c.l.b16 %v227
    %v265 = vunpack.c.l.b16 %v228
    %v266 = vunpack.c.l.b16 %v229
    %v267 = vunpack.c.l.b16 %v230
    %v268 = vpack.c.b16 %v253, %v252
    %v269 = vpack.c.b16 %v255, %v254
    %v270 = vpack.c.b16 %v257, %v256
    %v271 = vpack.c.b16 %v259, %v258
    %v272 = vpack.c.b16 %v261, %v260
    %v273 = vpack.c.b16 %v263, %v262
    %v274 = vpack.c.b16 %v265, %v264
    %v275 = vpack.c.b16 %v267, %v266
    %284 = vmatprep.subr.bf16.mxu0 0
    %285 = vmatpush1.bf16.msra.mxu0 %v275
    %286 = vmatprep.subr.bf16.mxu0 0
    %287 = vmatpush1.bf16.msra.mxu0 %v274
    %288 = vmatprep.subr.bf16.mxu0 0
    %289 = vmatpush1.bf16.msra.mxu0 %v273
    %290 = vmatprep.subr.bf16.mxu0 0
    %291 = vmatpush1.bf16.msra.mxu0 %v272
    %292 = vmatprep.subr.bf16.mxu0 0
    %293 = vmatpush1.bf16.msra.mxu0 %v271
    %294 = vmatprep.subr.bf16.mxu0 0
    %295 = vmatpush1.bf16.msra.mxu0 %v270
    %296 = vmatprep.subr.bf16.mxu0 0
    %297 = vmatpush1.bf16.msra.mxu0 %v269
    %298 = vmatprep.subr.bf16.mxu0 0
    %299 = vmatpush1.bf16.msra.mxu0 %v268
    %300 = vmatprep.subr.bf16.mxu0 0
    %301 = vmatpush2.bf16.msra.mxu0 0
    %302 = vmatprep.subr.bf16.mxu0 0
    %303 = vmatpush2.bf16.msra.mxu0 0
    %304 = vmatprep.subr.bf16.mxu0 0
    %305 = vmatpush2.bf16.msra.mxu0 0
    %306 = vmatprep.subr.bf16.mxu0 0
    %307 = vmatpush2.bf16.msra.mxu0 0
    %308 = vmatprep.subr.bf16.mxu0 0
    %309 = vmatpush2.bf16.msra.mxu0 0
    %310 = vmatprep.subr.bf16.mxu0 0
    %311 = vmatpush2.bf16.msra.mxu0 0
    %312 = vmatprep.subr.bf16.mxu0 0
    %313 = vmatpush2.bf16.msra.mxu0 0
    %314 = vmatprep.subr.bf16.mxu0 0
    %315 = vmatpush2.bf16.msra.mxu0 0
    %316 = vmatprep.mubr.bf16.mxu0 0
    %317 = vmatmul.mubr.bf16.gmra.mxu0 %v214
    %v318 = vpop.f32.mrf.mxu0
    %v319 = vadd.f32 %v235, %v318
    %v320 = vpop.f32.mrf.mxu0
    %v321 = vpop.f32.mrf.mxu0
    %v322 = vadd.f32 %v235, %v321
    %v323 = vpop.f32.mrf.mxu0
    %324 = vdwg.mxu0
    %v325 = vld [vmem:[%s4 + $0x1] sm:$0x1]
    %v326 = vld [vmem:[%s4 + $0x2] sm:$0x1]
    %327 = vadd.xlane.f32.xlu0 %v319
    %v328 = vpop.xlane.xlu0 %327
    %329 = vadd.xlane.f32.xlu0 %v322
    %v330 = vpop.xlane.xlu0 %329
    %v331 = vmul.f32 %v328, 0.03125
    %v332 = vmul.f32 %v330, 0.03125
    %v333 = vsub.f32 %v319, %v331
    %v334 = vsub.f32 %v322, %v332
    %v335 = vmul.f32 %v333, %v333
    %v336 = vmul.f32 %v334, %v334
    %337 = vadd.xlane.f32.xlu0 %v335
    %v338 = vpop.xlane.xlu0 %337
    %339 = vadd.xlane.f32.xlu0 %v336
    %v340 = vpop.xlane.xlu0 %339
    %v341 = vmul.f32 %v331, %v331
    %v342 = vmul.f32 %v332, %v332
    %v343 = vmul.f32 %v341, 96.0
    %v344 = vmul.f32 %v342, 96.0
    %v345 = vsub.f32 %v338, %v343
    %v346 = vsub.f32 %v340, %v344
    %v347 = vmul.f32 %v345, 0.03125
    %v348 = vmul.f32 %v346, 0.03125
    %v349 = vadd.f32 %v347, 1e-05
    %v350 = vadd.f32 %v348, 1e-05
    %v351 = vrsqrt.pop %v349
    %v352 = vrsqrt.pop %v350
    %v353 = vmul.f32 %v333, %v351
    %v354 = vmul.f32 %v334, %v352
    %v355 = vlaneseq
    %v356 = vshrl.u32 %v355, 7
    %v357 = vsub.s32 0, %v356
    %v358 = vrot.slane %v325, %v357
    %v359 = vmul.f32 %v353, %v358
    %v360 = vmul.f32 %v354, %v358
    %v361 = vlaneseq
    %v362 = vshrl.u32 %v361, 7
    %v363 = vsub.s32 0, %v362
    %v364 = vrot.slane %v326, %v363
    %v365 = vadd.f32 %v359, %v364
    %v366 = vadd.f32 %v360, %v364
    %v367 = vmax.f32 %v365, 0.0
    %v368 = vmax.f32 %v366, 0.0
    %v369 = vpack.c.bf16 %v368, %v367
    %v370 = vld [vmem:[#allocation7] sm:$0xf]
    %v371 = vld [vmem:[#allocation7 + $0x4] sm:$0xf]
    %v372 = vld [vmem:[#allocation7 + $0x8] sm:$0xf]
    %v373 = vld [vmem:[#allocation7 + $0xc] sm:$0xf]
    %v374 = vld [vmem:[#allocation7 + $0x10] sm:$0xf]
    %v375 = vld [vmem:[#allocation7 + $0x14] sm:$0xf]
    %v376 = vld [vmem:[#allocation7 + $0x18] sm:$0xf]
    %v377 = vld [vmem:[#allocation7 + $0x1c] sm:$0xf]
    %v378 = vld [vmem:[#allocation7 + $0x20] sm:$0xf]
    %v379 = vld [vmem:[#allocation7 + $0x24] sm:$0xf]
    %v380 = vld [vmem:[#allocation7 + $0x28] sm:$0xf]
    %v381 = vld [vmem:[#allocation7 + $0x2c] sm:$0xf]
    %v382 = vld [vmem:[#allocation7 + $0x30] sm:$0xf]
    %v383 = vld [vmem:[#allocation7 + $0x34] sm:$0xf]
    %v384 = vld [vmem:[#allocation7 + $0x38] sm:$0xf]
    %v385 = vld [vmem:[#allocation7 + $0x3c] sm:$0xf]
    %v386 = vld [vmem:[%s6] sm:$0x1]
    %v387 = vlaneseq
    %v388 = vshrl.u32 %v387, 7
    %v389 = vsub.s32 0, %v388
    %v390 = vrot.slane %v386, %v389
    %v407 = vunpack.c.l.b16 %v370
    %v408 = vunpack.c.l.b16 %v371
    %v409 = vunpack.c.l.b16 %v372
    %v410 = vunpack.c.l.b16 %v373
    %v411 = vunpack.c.l.b16 %v374
    %v412 = vunpack.c.l.b16 %v375
    %v413 = vunpack.c.l.b16 %v376
    %v414 = vunpack.c.l.b16 %v377
    %v415 = vunpack.c.l.b16 %v378
    %v416 = vunpack.c.l.b16 %v379
    %v417 = vunpack.c.l.b16 %v380
    %v418 = vunpack.c.l.b16 %v381
    %v419 = vunpack.c.l.b16 %v382
    %v420 = vunpack.c.l.b16 %v383
    %v421 = vunpack.c.l.b16 %v384
    %v422 = vunpack.c.l.b16 %v385
    %v423 = vpack.c.b16 %v408, %v407
    %v424 = vpack.c.b16 %v410, %v409
    %v425 = vpack.c.b16 %v412, %v411
    %v426 = vpack.c.b16 %v414, %v413
    %v427 = vpack.c.b16 %v416, %v415
    %v428 = vpack.c.b16 %v418, %v417
    %v429 = vpack.c.b16 %v420, %v419
    %v430 = vpack.c.b16 %v422, %v421
    %439 = vmatprep.subr.bf16.mxu0 0
    %440 = vmatpush1.bf16.msra.mxu0 %v430
    %441 = vmatprep.subr.bf16.mxu0 0
    %442 = vmatpush1.bf16.msra.mxu0 %v429
    %443 = vmatprep.subr.bf16.mxu0 0
    %444 = vmatpush1.bf16.msra.mxu0 %v428
    %445 = vmatprep.subr.bf16.mxu0 0
    %446 = vmatpush1.bf16.msra.mxu0 %v427
    %447 = vmatprep.subr.bf16.mxu0 0
    %448 = vmatpush1.bf16.msra.mxu0 %v426
    %449 = vmatprep.subr.bf16.mxu0 0
    %450 = vmatpush1.bf16.msra.mxu0 %v425
    %451 = vmatprep.subr.bf16.mxu0 0
    %452 = vmatpush1.bf16.msra.mxu0 %v424
    %453 = vmatprep.subr.bf16.mxu0 0
    %454 = vmatpush1.bf16.msra.mxu0 %v423
    %455 = vmatprep.subr.bf16.mxu0 0
    %456 = vmatpush2.bf16.msra.mxu0 0
    %457 = vmatprep.subr.bf16.mxu0 0
    %458 = vmatpush2.bf16.msra.mxu0 0
    %459 = vmatprep.subr.bf16.mxu0 0
    %460 = vmatpush2.bf16.msra.mxu0 0
    %461 = vmatprep.subr.bf16.mxu0 0
    %462 = vmatpush2.bf16.msra.mxu0 0
    %463 = vmatprep.subr.bf16.mxu0 0
    %464 = vmatpush2.bf16.msra.mxu0 0
    %465 = vmatprep.subr.bf16.mxu0 0
    %466 = vmatpush2.bf16.msra.mxu0 0
    %467 = vmatprep.subr.bf16.mxu0 0
    %468 = vmatpush2.bf16.msra.mxu0 0
    %469 = vmatprep.subr.bf16.mxu0 0
    %470 = vmatpush2.bf16.msra.mxu0 0
    %471 = vmatprep.mubr.bf16.mxu0 0
    %472 = vmatmul.mubr.bf16.gmra.mxu0 %v369
    %v473 = vpop.f32.mrf.mxu0
    %v474 = vadd.f32 %v390, %v473
    %v475 = vpop.f32.mrf.mxu0
    %v476 = vpop.f32.mrf.mxu0
    %v477 = vadd.f32 %v390, %v476
    %v478 = vpop.f32.mrf.mxu0
    %479 = vdwg.mxu0
    %v480 = vld [vmem:[%s6 + $0x1] sm:$0x1]
    %v481 = vld [vmem:[%s6 + $0x2] sm:$0x1]
    %482 = vadd.xlane.f32.xlu0 %v474
    %v483 = vpop.xlane.xlu0 %482
    %484 = vadd.xlane.f32.xlu0 %v477
    %v485 = vpop.xlane.xlu0 %484
    %v486 = vmul.f32 %v483, 0.03125
    %v487 = vmul.f32 %v485, 0.03125
    %v488 = vsub.f32 %v474, %v486
    %v489 = vsub.f32 %v477, %v487
    %v490 = vmul.f32 %v488, %v488
    %v491 = vmul.f32 %v489, %v489
    %492 = vadd.xlane.f32.xlu0 %v490
    %v493 = vpop.xlane.xlu0 %492
    %494 = vadd.xlane.f32.xlu0 %v491
    %v495 = vpop.xlane.xlu0 %494
    %v496 = vmul.f32 %v486, %v486
    %v497 = vmul.f32 %v487, %v487
    %v498 = vmul.f32 %v496, 96.0
    %v499 = vmul.f32 %v497, 96.0
    %v500 = vsub.f32 %v493, %v498
    %v501 = vsub.f32 %v495, %v499
    %v502 = vmul.f32 %v500, 0.03125
    %v503 = vmul.f32 %v501, 0.03125
    %v504 = vadd.f32 %v502, 1e-05
    %v505 = vadd.f32 %v503, 1e-05
    %v506 = vrsqrt.pop %v504
    %v507 = vrsqrt.pop %v505
    %v508 = vmul.f32 %v488, %v506
    %v509 = vmul.f32 %v489, %v507
    %v510 = vlaneseq
    %v511 = vshrl.u32 %v510, 7
    %v512 = vsub.s32 0, %v511
    %v513 = vrot.slane %v480, %v512
    %v514 = vmul.f32 %v508, %v513
    %v515 = vmul.f32 %v509, %v513
    %v516 = vlaneseq
    %v517 = vshrl.u32 %v516, 7
    %v518 = vsub.s32 0, %v517
    %v519 = vrot.slane %v481, %v518
    %v520 = vadd.f32 %v514, %v519
    %v521 = vadd.f32 %v515, %v519
    %v522 = vmax.f32 %v520, 0.0
    %v523 = vmax.f32 %v521, 0.0
    %v524 = vpack.c.bf16 %v523, %v522
    %v525 = vld [vmem:[#allocation9] sm:$0xf]
    %v526 = vld [vmem:[#allocation9 + $0x4] sm:$0xf]
    %v527 = vld [vmem:[#allocation9 + $0x8] sm:$0xf]
    %v528 = vld [vmem:[#allocation9 + $0xc] sm:$0xf]
    %v529 = vld [vmem:[#allocation9 + $0x10] sm:$0xf]
    %v530 = vld [vmem:[#allocation9 + $0x14] sm:$0xf]
    %v531 = vld [vmem:[#allocation9 + $0x18] sm:$0xf]
    %v532 = vld [vmem:[#allocation9 + $0x1c] sm:$0xf]
    %v533 = vld [vmem:[#allocation9 + $0x20] sm:$0xf]
    %v534 = vld [vmem:[#allocation9 + $0x24] sm:$0xf]
    %v535 = vld [vmem:[#allocation9 + $0x28] sm:$0xf]
    %v536 = vld [vmem:[#allocation9 + $0x2c] sm:$0xf]
    %v537 = vld [vmem:[#allocation9 + $0x30] sm:$0xf]
    %v538 = vld [vmem:[#allocation9 + $0x34] sm:$0xf]
    %v539 = vld [vmem:[#allocation9 + $0x38] sm:$0xf]
    %v540 = vld [vmem:[#allocation9 + $0x3c] sm:$0xf]
    %v541 = vld [vmem:[%s8] sm:$0x1]
    %v543 = vlaneseq
    %v544 = vshrl.u32 %v543, 7
    %v545 = vsub.s32 0, %v544
    %v546 = vrot.slane %v541, %v545
    %v564 = vunpack.c.l.b16 %v525
    %v565 = vunpack.c.l.b16 %v526
    %v566 = vunpack.c.l.b16 %v527
    %v567 = vunpack.c.l.b16 %v528
    %v568 = vunpack.c.l.b16 %v529
    %v569 = vunpack.c.l.b16 %v530
    %v570 = vunpack.c.l.b16 %v531
    %v571 = vunpack.c.l.b16 %v532
    %v572 = vunpack.c.l.b16 %v533
    %v573 = vunpack.c.l.b16 %v534
    %v574 = vunpack.c.l.b16 %v535
    %v575 = vunpack.c.l.b16 %v536
    %v576 = vunpack.c.l.b16 %v537
    %v577 = vunpack.c.l.b16 %v538
    %v578 = vunpack.c.l.b16 %v539
    %v579 = vunpack.c.l.b16 %v540
    %v580 = vpack.c.b16 %v565, %v564
    %v581 = vpack.c.b16 %v567, %v566
    %v582 = vpack.c.b16 %v569, %v568
    %v583 = vpack.c.b16 %v571, %v570
    %v584 = vpack.c.b16 %v573, %v572
    %v585 = vpack.c.b16 %v575, %v574
    %v586 = vpack.c.b16 %v577, %v576
    %v587 = vpack.c.b16 %v579, %v578
    %596 = vmatprep.subr.bf16.mxu0 0
    %597 = vmatpush1.bf16.msra.mxu0 %v587
    %598 = vmatprep.subr.bf16.mxu0 0
    %599 = vmatpush1.bf16.msra.mxu0 %v586
    %600 = vmatprep.subr.bf16.mxu0 0
    %601 = vmatpush1.bf16.msra.mxu0 %v585
    %602 = vmatprep.subr.bf16.mxu0 0
    %603 = vmatpush1.bf16.msra.mxu0 %v584
    %604 = vmatprep.subr.bf16.mxu0 0
    %605 = vmatpush1.bf16.msra.mxu0 %v583
    %606 = vmatprep.subr.bf16.mxu0 0
    %607 = vmatpush1.bf16.msra.mxu0 %v582
    %608 = vmatprep.subr.bf16.mxu0 0
    %609 = vmatpush1.bf16.msra.mxu0 %v581
    %610 = vmatprep.subr.bf16.mxu0 0
    %611 = vmatpush1.bf16.msra.mxu0 %v580
    %612 = vmatprep.subr.bf16.mxu0 0
    %613 = vmatpush2.bf16.msra.mxu0 0
    %614 = vmatprep.subr.bf16.mxu0 0
    %615 = vmatpush2.bf16.msra.mxu0 0
    %616 = vmatprep.subr.bf16.mxu0 0
    %617 = vmatpush2.bf16.msra.mxu0 0
    %618 = vmatprep.subr.bf16.mxu0 0
    %619 = vmatpush2.bf16.msra.mxu0 0
    %620 = vmatprep.subr.bf16.mxu0 0
    %621 = vmatpush2.bf16.msra.mxu0 0
    %622 = vmatprep.subr.bf16.mxu0 0
    %623 = vmatpush2.bf16.msra.mxu0 0
    %624 = vmatprep.subr.bf16.mxu0 0
    %625 = vmatpush2.bf16.msra.mxu0 0
    %626 = vmatprep.subr.bf16.mxu0 0
    %627 = vmatpush2.bf16.msra.mxu0 0
    %628 = vmatprep.mubr.bf16.mxu0 0
    %629 = vmatmul.mubr.bf16.gmra.mxu0 %v524
    %v630 = vpop.f32.mrf.mxu0
    %v631 = vadd.f32 %v546, %v630
    %v632 = vpop.f32.mrf.mxu0
    %v633 = vpop.f32.mrf.mxu0
    %v634 = vadd.f32 %v546, %v633
    %v635 = vpop.f32.mrf.mxu0
    %636 = vdwg.mxu0
    %v637 = vpack.c.bf16 %v634, %v631
    %v639 = vunpack.c.l.b16 %v637
    %v640 = vunpack.c.h.b16 %v637
    %v641 = vpack.c.b16 %v639, %v639
    %v642 = vpack.c.b16 %v640, %v640
    %645 = vst [vmem:[%s9] sm:$0xf] %v641
    %646 = vst [vmem:[%s9 + $0x4] sm:$0xf] %v642
    // Predicated region
    $region58: #{traj_decoder_forward.1} parent=1 // pred_check
      _
    $region59: #{traj_decoder_forward.1} parent=1 // pred_check_branch
      %648 = sbr.rel (0) target = $region61
    $region60: #{traj_decoder_forward.1} parent=1 // pred_region
      _
    $region61: #{traj_decoder_forward.1} parent=1 // pred_fallthru
      _
    // Predicated region
    $region62: #{traj_decoder_forward.1} parent=1 // pred_check
      _
    $region63: #{traj_decoder_forward.1} parent=1 // pred_check_branch
      %650 = sbr.rel (0) target = $region65
    $region64: #{traj_decoder_forward.1} parent=1 // pred_region
      _
    $region65: #{traj_decoder_forward.1} parent=1 // pred_fallthru
      _
    %651 = vsyncpa [#allocation3], 1
    %652 = vsyncpa [#allocation5], 1
    %653 = vsyncpa [#allocation8], 1

</llo_original>
